<compile_context>
chip_gen: v7x
topology: tpu7x:2x2x1
jax: 0.10.0
libtpu: 0.0.40
codegen_flags: <defaults>
</compile_context>

<pallas_src>
import functools
import math

import jax
import jax.numpy as jnp
from jax.experimental import pallas as pl
from jax.experimental.pallas import tpu as pltpu

_MIB = 1024 * 1024


# ----------------------------------------------------------------------------
# Pallas kernels
# ----------------------------------------------------------------------------
def _shortcut_bottleneck_kernel(x_ref, idn_ref, w_ref, shift_ref, o_ref):
    """out = x + (w_bn @ identity_sub + shift), NCHW-native blocks.

    x_ref:     (1, Cout, T)  residual-branch tile (native dtype)
    idn_ref:   (1, Cin,  T)  identity-branch tile (already spatially subsampled)
    w_ref:     (Cout, Cin)   1x1 conv weight with BN scale folded in
    shift_ref: (Cout, 1)     folded BN shift = beta - mean*scale  (f32)
    o_ref:     (1, Cout, T)
    """
    y = jnp.dot(w_ref[...], idn_ref[0], preferred_element_type=jnp.float32)
    y = y + shift_ref[...]
    o_ref[0] = (x_ref[0].astype(jnp.float32) + y).astype(o_ref.dtype)


def _shortcut_identity_kernel(x_ref, idn_ref, o_ref):
    """out = x + identity (no bottleneck)."""
    o_ref[...] = x_ref[...] + idn_ref[...]


# ----------------------------------------------------------------------------
# Static sizing helpers
# ----------------------------------------------------------------------------
def _rup(x, m):
    return ((x + m - 1) // m) * m


def _sublane_align(dtype):
    # f32 -> 8 rows per sublane tile; bf16/fp16 -> 16; int8/fp8 -> 32.
    return max(8, 32 // max(jnp.dtype(dtype).itemsize, 1))


@functools.lru_cache(maxsize=1)
def _vmem_budget_and_limit():
    """(data budget for pipeline buffers, explicit scoped-VMEM limit)."""
    cap = 128 * _MIB
    try:
        cap = int(pltpu.get_tpu_info().vmem_capacity_bytes)
    except Exception:
        pass  # fall back to a conservative default
    if cap <= 64 * _MIB:           # v7x-class: 64 MiB VMEM per TensorCore
        budget = 24 * _MIB
    else:                          # v5e / v6e: 128 MiB VMEM
        budget = 40 * _MIB
    limit = min(budget + 24 * _MIB, cap * 9 // 10)
    return budget, limit


def _pick_row_tile(rows, bytes_per_row, budget, align):
    t = budget // max(bytes_per_row, 1)
    if t >= rows:
        return rows
    t = max(align, (t // align) * align)
    return rows if t >= rows else t


def _pick_lane_tile(lanes, bytes_per_lane, budget):
    t = budget // max(bytes_per_lane, 1)
    if t >= lanes:
        return lanes
    t = max(128, (t // 128) * 128)
    return lanes if t >= lanes else t


# ----------------------------------------------------------------------------
# Wrapper ("module")
# ----------------------------------------------------------------------------
class ShortcutConnection:
    """JAX/Pallas port of `_ShortcutConnection`.

    If num_in_channel != num_out_channel or stride != 1, applies a 1x1 conv
    (bias=False, padding = ksize//2 = 0) followed by BatchNorm2d (inference
    semantics with deterministic parameters) to `identity` before adding it
    to `x`.  Otherwise returns x + identity.  Tensors are NCHW.
    """

    def __init__(self, num_in_channel: int, num_out_channel: int, stride: int,
                 key=None, eps: float = 1e-5):
        self.cin = num_in_channel
        self.cout = num_out_channel
        self.stride = stride
        self.eps = eps
        self.has_bottleneck = (num_in_channel != num_out_channel) or (stride != 1)

        if self.has_bottleneck:
            if key is None:
                key = jax.random.PRNGKey(42)
            k_w, k_g, k_b, k_m, k_v = jax.random.split(key, 5)
            bound = 1.0 / math.sqrt(num_in_channel)
            # PyTorch conv weight layout (Cout, Cin, 1, 1) -> stored (Cout, Cin)
            self.w = jax.random.uniform(k_w, (num_out_channel, num_in_channel),
                                        minval=-bound, maxval=bound,
                                        dtype=jnp.float32)
            # BatchNorm2d parameters (inference mode with deterministic stats)
            self.gamma = jax.random.uniform(k_g, (num_out_channel,),
                                            minval=0.5, maxval=1.5, dtype=jnp.float32)
            self.beta = jax.random.uniform(k_b, (num_out_channel,),
                                           minval=-0.5, maxval=0.5, dtype=jnp.float32)
            self.running_mean = jax.random.uniform(k_m, (num_out_channel,),
                                                   minval=-0.5, maxval=0.5,
                                                   dtype=jnp.float32)
            self.running_var = jax.random.uniform(k_v, (num_out_channel,),
                                                  minval=0.5, maxval=1.5,
                                                  dtype=jnp.float32)
            # Fold BN into the weight (scale) and a single per-channel shift.
            scale = self.gamma / jnp.sqrt(self.running_var + self.eps)     # (Cout,)
            self.w_bn = self.w * scale[:, None]                            # (Cout, Cin)
            self.shift = (self.beta - self.running_mean * scale
                          ).reshape(num_out_channel, 1)                    # (Cout, 1) f32
            # TODO(synk): training-mode BatchNorm (batch statistics) not
            # implemented; inference semantics with running stats are used.

    # ---- forward -----------------------------------------------------------
    def __call__(self, x, identity):
        if not self.has_bottleneck:
            return self._identity_path(x, identity)
        return self._bottleneck_path(x, identity)

    @functools.partial(jax.jit, static_argnums=0)
    def _identity_path(self, x, identity):
        shape = x.shape
        total = math.prod(shape)

        # Lane-dense 2-D view of the flat buffer (add is layout agnostic).
        cols = 0
        for c in (8192, 4096, 2048, 1024, 512, 256, 128):
            if total % c == 0:
                cols = c
                break
        if cols == 0:
            # TODO(synk): totals not divisible by 128 fall back to the native
            # last dim; if that is < 128 stores are masked (partial lanes).
            cols = shape[-1]
        rows = total // cols
        x2 = x.reshape(rows, cols)
        i2 = identity.reshape(rows, cols)

        itemsize = jnp.dtype(x.dtype).itemsize
        align = _sublane_align(x.dtype)
        budget, vmem_limit = _vmem_budget_and_limit()
        bytes_per_row = 2 * 3 * _rup(cols, 128) * itemsize   # x, idn, out; x2 buffers
        tr = _pick_row_tile(rows, bytes_per_row, budget, align)
        grid = (pl.cdiv(rows, tr),)

        cost = pl.CostEstimate(flops=total, transcendentals=0,
                               bytes_accessed=3 * total * itemsize)

        out = pl.pallas_call(
            _shortcut_identity_kernel,
            out_shape=jax.ShapeDtypeStruct((rows, cols), x.dtype),
            grid=grid,
            in_specs=[pl.BlockSpec((tr, cols), lambda i: (i, 0)),
                      pl.BlockSpec((tr, cols), lambda i: (i, 0))],
            out_specs=pl.BlockSpec((tr, cols), lambda i: (i, 0)),
            compiler_params=pltpu.CompilerParams(
                dimension_semantics=("parallel",),
                vmem_limit_bytes=vmem_limit),
            cost_estimate=cost,
        )(x2, i2)
        return out.reshape(shape)

    @functools.partial(jax.jit, static_argnums=0)
    def _bottleneck_path(self, x, identity):
        s = self.stride
        n, cout, ho, wo = x.shape
        cin = self.cin
        assert cout == self.cout

        # 1x1 conv with padding = ksize//2 = 0 and stride s  ==  channel matmul
        # on a spatially subsampled identity.  For s == 1 there is no glue at
        # all; for s > 1 the subsample is one XLA strided-slice pass.
        # TODO(synk): fuse the strided subsample into the kernel DMA so the
        # subsampled identity is never materialised in HBM when stride > 1.
        idn = identity if s == 1 else identity[:, :, ::s, ::s]
        assert idn.shape == (n, cin, ho, wo)

        hw = ho * wo
        # NCHW-native: free reshapes only, no transposes.
        x3 = x.reshape(n, cout, hw)
        i3 = idn.reshape(n, cin, hw)

        w = self.w_bn.astype(x.dtype)          # (Cout, Cin), BN scale folded in
        shift = self.shift                     # (Cout, 1) f32

        itemsize = jnp.dtype(x.dtype).itemsize
        sub = _sublane_align(x.dtype)
        budget, vmem_limit = _vmem_budget_and_limit()

        # VMEM accounting: weight + shift counted as double-buffered (their
        # block index is constant across the grid, so they stay resident).
        w_bytes = 2 * _rup(cout, sub) * _rup(cin, 128) * itemsize
        shift_bytes = 2 * _rup(cout, 8) * 128 * 4
        data_budget = max(budget - w_bytes - shift_bytes, 4 * _MIB)
        # x, idn, out tiles, each double-buffered, per spatial lane.
        bytes_per_lane = 2 * (2 * _rup(cout, sub) + _rup(cin, sub)) * itemsize
        t = _pick_lane_tile(hw, bytes_per_lane, data_budget)

        grid = (n, pl.cdiv(hw, t))
        m = n * hw
        cost = pl.CostEstimate(
            flops=2 * m * cin * cout + 3 * m * cout,
            transcendentals=0,
            bytes_accessed=(m * (2 * cout + cin) + cout * cin) * itemsize + cout * 4)

        out = pl.pallas_call(
            _shortcut_bottleneck_kernel,
            out_shape=jax.ShapeDtypeStruct((n, cout, hw), x.dtype),
            grid=grid,
            in_specs=[pl.BlockSpec((1, cout, t), lambda b, j: (b, 0, j)),   # x
                      pl.BlockSpec((1, cin, t), lambda b, j: (b, 0, j)),    # idn
                      pl.BlockSpec((cout, cin), lambda b, j: (0, 0)),       # w (resident)
                      pl.BlockSpec((cout, 1), lambda b, j: (0, 0))],        # shift (resident)
            out_specs=pl.BlockSpec((1, cout, t), lambda b, j: (b, 0, j)),
            compiler_params=pltpu.CompilerParams(
                dimension_semantics=("parallel", "parallel"),
                vmem_limit_bytes=vmem_limit),
            cost_estimate=cost,
        )(x3, i3, w, shift)

        return out.reshape(n, cout, ho, wo)


# ----------------------------------------------------------------------------
# Pure-JAX reference for a sanity check
# ----------------------------------------------------------------------------
def _reference(mod: ShortcutConnection, x, identity):
    if not mod.has_bottleneck:
        return x + identity
    s = mod.stride
    idn = identity[:, :, ::s, ::s].astype(jnp.float32)        # (N, Cin, Ho, Wo)
    y = jnp.einsum('oc,nchw->nohw', mod.w, idn)
    scale = mod.gamma / jnp.sqrt(mod.running_var + mod.eps)
    shift = mod.beta - mod.running_mean * scale
    y = y * scale[None, :, None, None] + shift[None, :, None, None]
    return (x.astype(jnp.float32) + y).astype(x.dtype)


# ----------------------------------------------------------------------------
if __name__ == "__main__":
    key = jax.random.PRNGKey(0)
    k1, k2, kmod = jax.random.split(key, 3)

    # small shapes: N=2, Cin=4, Cout=8, H=W=16, stride=2  -> Ho=Wo=8
    N, CIN, COUT, H, W, STRIDE = 2, 4, 8, 16, 16, 2
    HO, WO = H // STRIDE, W // STRIDE

    x = jax.random.normal(k1, (N, COUT, HO, WO), dtype=jnp.float32)       # NCHW
    identity = jax.random.normal(k2, (N, CIN, H, W), dtype=jnp.float32)   # NCHW

    mod = ShortcutConnection(CIN, COUT, STRIDE, key=kmod)
    out = jax.block_until_ready(mod(x, identity))
    ref = _reference(mod, x, identity)
    assert out.shape == (N, COUT, HO, WO)
    assert jnp.allclose(out, ref, atol=1e-4, rtol=1e-4), "bottleneck mismatch"

    # stride-1 bottleneck (channel matching only): zero layout glue path
    mod_s1 = ShortcutConnection(CIN, COUT, 1, key=kmod)
    x_s1 = jax.random.normal(k1, (N, COUT, H, W), dtype=jnp.float32)
    id_s1 = jax.random.normal(k2, (N, CIN, H, W), dtype=jnp.float32)
    out_s1 = jax.block_until_ready(mod_s1(x_s1, id_s1))
    ref_s1 = _reference(mod_s1, x_s1, id_s1)
    assert jnp.allclose(out_s1, ref_s1, atol=1e-4, rtol=1e-4), "stride-1 mismatch"

    # trivial identity path (no bottleneck)
    mod_id = ShortcutConnection(COUT, COUT, 1)
    out_id = jax.block_until_ready(mod_id(x, x))
    assert out_id.shape == x.shape
    assert jnp.allclose(out_id, x + x, atol=1e-6), "identity-path mismatch"

    print("KERNEL_OK")
</pallas_src>

<mosaic_0001>
module attributes {stable_mosaic.version = 11 : i64} {
  func.func @_shortcut_bottleneck_kernel(%arg0: i32, %arg1: i32, %arg2: memref<1x8x64xf32, #tpu.memory_space<vmem>>, %arg3: memref<1x4x64xf32, #tpu.memory_space<vmem>>, %arg4: memref<8x4xf32, #tpu.memory_space<vmem>>, %arg5: memref<8x1xf32, #tpu.memory_space<vmem>>, %arg6: memref<1x8x64xf32, #tpu.memory_space<vmem>>) attributes {dimension_semantics = [#tpu.dimension_semantics<parallel>, #tpu.dimension_semantics<parallel>], iteration_bounds = array<i64: 2, 1>, scalar_prefetch = 0 : i64, scratch_operands = 0 : i64, tpu.core_type = #tpu.core_type<tc>, window_params = [{transform_indices = @transform_0, window_bounds = array<i64: 1, 8, 64>}, {transform_indices = @transform_1, window_bounds = array<i64: 1, 4, 64>}, {pipeline_mode = #tpu.pipeline_mode<synchronous>, transform_indices = @transform_2, window_bounds = array<i64: 8, 4>}, {pipeline_mode = #tpu.pipeline_mode<synchronous>, transform_indices = @transform_3, window_bounds = array<i64: 8, 1>}, {transform_indices = @transform_4, window_bounds = array<i64: 1, 8, 64>}]} {
    %c0 = arith.constant 0 : index
    %c0_0 = arith.constant 0 : index
    %0 = vector.load %arg4[%c0, %c0_0] : memref<8x4xf32, #tpu.memory_space<vmem>>, vector<8x4xf32>
    %c0_1 = arith.constant 0 : index
    %c0_2 = arith.constant 0 : index
    %c0_3 = arith.constant 0 : index
    %1 = vector.load %arg3[%c0_1, %c0_2, %c0_3] : memref<1x4x64xf32, #tpu.memory_space<vmem>>, vector<1x4x64xf32>
    %2 = vector.shape_cast %1 : vector<1x4x64xf32> to vector<4x64xf32>
    %cst = arith.constant dense<0.000000e+00> : vector<8x64xf32>
    %3 = tpu.matmul %0, %2, %cst {dimension_numbers = #tpu.dot_dimension_numbers<[1], [0], [0], [1], [0, 0, 1, 1], [], []>} : vector<8x4xf32>, vector<4x64xf32>, vector<8x64xf32> -> vector<8x64xf32>
    %c0_4 = arith.constant 0 : index
    %c0_5 = arith.constant 0 : index
    %4 = vector.load %arg5[%c0_4, %c0_5] : memref<8x1xf32, #tpu.memory_space<vmem>>, vector<8x1xf32>
    %5 = vector.broadcast %4 : vector<8x1xf32> to vector<8x64xf32>
    %6 = arith.addf %3, %5 : vector<8x64xf32>
    %c0_6 = arith.constant 0 : index
    %c0_7 = arith.constant 0 : index
    %c0_8 = arith.constant 0 : index
    %7 = vector.load %arg2[%c0_6, %c0_7, %c0_8] : memref<1x8x64xf32, #tpu.memory_space<vmem>>, vector<1x8x64xf32>
    %8 = vector.shape_cast %7 : vector<1x8x64xf32> to vector<8x64xf32>
    %9 = arith.addf %8, %6 : vector<8x64xf32>
    %c0_9 = arith.constant 0 : index
    %c0_10 = arith.constant 0 : index
    %c0_11 = arith.constant 0 : index
    %10 = vector.load %arg6[%c0_9, %c0_10, %c0_11] : memref<1x8x64xf32, #tpu.memory_space<vmem>>, vector<1x8x64xf32>
    %11 = vector.shape_cast %10 : vector<1x8x64xf32> to vector<8x64xf32>
    %12 = vector.shape_cast %9 : vector<8x64xf32> to vector<1x8x64xf32>
    tpu.vector_store %arg6[%c0_9, %c0_10, %c0_11], %12 {strides = array<i32>} : memref<1x8x64xf32, #tpu.memory_space<vmem>>, vector<1x8x64xf32>,
    return
  }
  func.func @transform_0(%arg0: i32, %arg1: i32) -> (i32, i32, i32) {
    %c0_i32 = arith.constant 0 : i32
    %c0_i32_0 = arith.constant 0 : i32
    return %arg0, %c0_i32, %arg1 : i32, i32, i32
  }
  func.func @transform_1(%arg0: i32, %arg1: i32) -> (i32, i32, i32) {
    %c0_i32 = arith.constant 0 : i32
    %c0_i32_0 = arith.constant 0 : i32
    return %arg0, %c0_i32, %arg1 : i32, i32, i32
  }
  func.func @transform_2(%arg0: i32, %arg1: i32) -> (i32, i32) {
    %c0_i32 = arith.constant 0 : i32
    %c0_i32_0 = arith.constant 0 : i32
    %c0_i32_1 = arith.constant 0 : i32
    return %c0_i32, %c0_i32_0 : i32, i32
  }
  func.func @transform_3(%arg0: i32, %arg1: i32) -> (i32, i32) {
    %c0_i32 = arith.constant 0 : i32
    %c0_i32_0 = arith.constant 0 : i32
    %c0_i32_1 = arith.constant 0 : i32
    return %c0_i32, %c0_i32_0 : i32, i32
  }
  func.func @transform_4(%arg0: i32, %arg1: i32) -> (i32, i32, i32) {
    %c0_i32 = arith.constant 0 : i32
    %c0_i32_0 = arith.constant 0 : i32
    return %arg0, %c0_i32, %arg1 : i32, i32, i32
  }
}

</mosaic_0001>

<llo_original>
// kernel: _bottleneck_path.1
$region0: #{_bottleneck_path.1}
  #allocation0 [shape = 'u32[]', space=smem, size = 0x4, offset = 0x4, fixed_abs, tag = 'smem constant byte address 0x4 - core index']
  #allocation1 [shape = 'u32[144,128]{1,0:T(1,128)}', space=vmem, size = 0x12000, scoped, tag = 'internal scratch']
  %s0 = inlined_call_operand.hbm [shape: f32[2,8,64], index: 0, kind: input, shape index: {}]
  %s1 = inlined_call_operand.hbm [shape: f32[2,4,64], index: 1, kind: input, shape index: {}]
  %s2 = inlined_call_operand.hbm [shape: f32[8,4], index: 2, kind: input, shape index: {}]
  %s3 = inlined_call_operand.hbm [shape: f32[8,1], index: 3, kind: input, shape index: {}]
  %s4 = inlined_call_operand.hbm [shape: f32[2,8,64], index: 4, kind: output, shape index: {}]
  %s5 = sld [smem:[#allocation0]]
  $region65: #{_bottleneck_path.1} parent=0
    _
  %s7 = ssub.s32 1, %s5
  %s8 = scalar_select 0, %s7, %s5
  $region1: #{_bottleneck_path.1} parent=0
    #allocation2 [shape = 'u8[8192]{0}', space=vmem, size = 0x2000, scoped, tag = 'input window, operand 0']
    #allocation3 [shape = 's32[2]{0}', space=sflag, size = 0x8, scoped, tag = 'scoped memory for _bottleneck_path.1']
    #allocation4 [shape = 's32[2]{0}', space=sflag, size = 0x8, scoped, tag = 'scoped memory for _bottleneck_path.1']
    #allocation5 [shape = 'u8[4096]{0}', space=vmem, size = 0x1000, scoped, tag = 'input window, operand 1']
    #allocation6 [shape = 's32[2]{0}', space=sflag, size = 0x8, scoped, tag = 'scoped memory for _bottleneck_path.1']
    #allocation7 [shape = 'u8[4096]{0}', space=vmem, size = 0x1000, scoped, tag = 'input window, operand 2, single buffered']
    #allocation8 [shape = 'u8[4096]{0}', space=vmem, size = 0x1000, scoped, tag = 'input window, operand 3, single buffered']
    #allocation9 [shape = 's32[1]{0}', space=sflag, size = 0x4, scoped, tag = 'scoped memory for _bottleneck_path.1']
    #allocation10 [shape = 'u8[8192]{0}', space=vmem, size = 0x2000, scoped, tag = 'output window, operand 0']
    %9 = vsyncpa [#allocation3], 0
    %s10 = scalar_lea.sflag [#allocation3], 1
    %11 = vsyncpa %s10, 0
    %12 = vsyncpa [#allocation6], 0
    %s13 = scalar_lea.sflag [#allocation6], 1
    %14 = vsyncpa %s13, 0
    %15 = vsyncpa [#allocation9], 0
    %16 = vsyncpa [#allocation4], 0
    %s17 = scalar_lea.sflag [#allocation4], 1
    %18 = vsyncpa %s17, 0
    loop: start=0, step=1, limit=4
    $region2: #{_bottleneck_path.1} parent=1 // loop_pre_header
      _
    $region3: #{_bottleneck_path.1} parent=1 // loop_header
      %s20 = sphi 0, %s24
      %p21 = scmp.ge.s32.totalorder %s20, 4
      %s27 = sphi 0, %s39
      %s28 = sphi 0, %s35
      %s29 = sphi 0, %s27
      %s30 = sphi 0, %s28
      %s31 = sphi 0, %s29
      %s32 = sphi 0, %s30
      %s44 = sphi 0, %s46
      %s47 = sphi 0, %s44
      %s48 = sphi 0, %s47
      %s64 = sphi 0, %s48
      %s72 = sphi 0, %s74
      %s75 = sphi 0, %s72
      %s76 = sphi 0, %s75
      %s92 = sphi 0, %s76
      %s96 = sphi 0, %s96
      %s98 = sphi 0, %s96
      %s99 = sphi 0, %s98
      %s113 = sphi 0, %s99
      %s117 = sphi 0, %s117
      %s119 = sphi 0, %s117
      %s120 = sphi 0, %s119
      %s134 = sphi 0, %s120
      %s142 = sphi 0, %s144
      %s145 = sphi 0, %s142
      %s146 = sphi 0, %s145
      %s162 = sphi 0, %s146
    $region4: #{_bottleneck_path.1} parent=1 // loop_header_branch
      %23 = sbr.rel (%p21) target = $region8
    $region5: #{_bottleneck_path.1} parent=1 // loop_body
      %s25 = ssub.s32 %s20, 1
      %s26 = ssub.s32 %s20, 2
      %s33 = sadd.s32 1, %s28
      %p34 = scmp.ge.s32.totalorder %s33, 1
      %s35 = scalar_select %p34, 0, %s33
      %s36 = sadd.s32 1, %s27
      %s37 = scalar_select %p34, %s36, %s27
      %p38 = scmp.ge.s32.totalorder %s37, 2
      %s39 = scalar_select %p38, 0, %s37
      %s40 = ssub.s32 %s27, %s39
      %s41 = ssub.s32 %s28, %s35
      %s42 = sor.u32 %s40, %s41
      %p43 = scmp.eq.s32.totalorder %s42, 0
      %s45 = sadd.s32 %s44, 1
      %s46 = scalar_select %p43, %s44, %s45
      %p49 = pneg %p43
      %p50 = scmp.eq.s32.totalorder %s20, 1
      %p51 = por %p49, %p50
      %p52 = scmp.ne.s32.totalorder %s44, %s47
      %p53 = scmp.eq.s32.totalorder %s20, 0
      %p54 = por %p52, %p53
      %p55 = scmp.ne.s32.totalorder %s44, %s47
      %p56 = scmp.eq.s32.totalorder %s25, 1
      %p57 = por %p55, %p56
      %p58 = scmp.ne.s32.totalorder %s47, %s48
      %p59 = scmp.eq.s32.totalorder %s25, 0
      %p60 = por %p58, %p59
      %p61 = scmp.ne.s32.totalorder %s47, %s48
      %p62 = scmp.eq.s32.totalorder %s26, 1
      %p63 = por %p61, %p62
      %p65 = scmp.ne.s32.totalorder %s48, %s64
      %p66 = scmp.eq.s32.totalorder %s26, 0
      %p67 = por %p65, %p66
      %s68 = ssub.s32 %s27, %s39
      %s69 = ssub.s32 %s28, %s35
      %s70 = sor.u32 %s68, %s69
      %p71 = scmp.eq.s32.totalorder %s70, 0
      %s73 = sadd.s32 %s72, 1
      %s74 = scalar_select %p71, %s72, %s73
      %p77 = pneg %p71
      %p78 = scmp.eq.s32.totalorder %s20, 1
      %p79 = por %p77, %p78
      %p80 = scmp.ne.s32.totalorder %s72, %s75
      %p81 = scmp.eq.s32.totalorder %s20, 0
      %p82 = por %p80, %p81
      %p83 = scmp.ne.s32.totalorder %s72, %s75
      %p84 = scmp.eq.s32.totalorder %s25, 1
      %p85 = por %p83, %p84
      %p86 = scmp.ne.s32.totalorder %s75, %s76
      %p87 = scmp.eq.s32.totalorder %s25, 0
      %p88 = por %p86, %p87
      %p89 = scmp.ne.s32.totalorder %s75, %s76
      %p90 = scmp.eq.s32.totalorder %s26, 1
      %p91 = por %p89, %p90
      %p93 = scmp.ne.s32.totalorder %s76, %s92
      %p94 = scmp.eq.s32.totalorder %s26, 0
      %p95 = por %p93, %p94
      %s97 = sadd.s32 %s96, 1
      %p100 = scmp.eq.s32.totalorder %s20, 1
      %p101 = scmp.ne.s32.totalorder %s96, %s98
      %p102 = scmp.eq.s32.totalorder %s20, 0
      %p103 = por %p101, %p102
      %p104 = scmp.ne.s32.totalorder %s96, %s98
      %p105 = scmp.eq.s32.totalorder %s25, 1
      %p106 = por %p104, %p105
      %p107 = scmp.ne.s32.totalorder %s98, %s99
      %p108 = scmp.eq.s32.totalorder %s25, 0
      %p109 = por %p107, %p108
      %p110 = scmp.ne.s32.totalorder %s98, %s99
      %p111 = scmp.eq.s32.totalorder %s26, 1
      %p112 = por %p110, %p111
      %p114 = scmp.ne.s32.totalorder %s99, %s113
      %p115 = scmp.eq.s32.totalorder %s26, 0
      %p116 = por %p114, %p115
      %s118 = sadd.s32 %s117, 1
      %p121 = scmp.eq.s32.totalorder %s20, 1
      %p122 = scmp.ne.s32.totalorder %s117, %s119
      %p123 = scmp.eq.s32.totalorder %s20, 0
      %p124 = por %p122, %p123
      %p125 = scmp.ne.s32.totalorder %s117, %s119
      %p126 = scmp.eq.s32.totalorder %s25, 1
      %p127 = por %p125, %p126
      %p128 = scmp.ne.s32.totalorder %s119, %s120
      %p129 = scmp.eq.s32.totalorder %s25, 0
      %p130 = por %p128, %p129
      %p131 = scmp.ne.s32.totalorder %s119, %s120
      %p132 = scmp.eq.s32.totalorder %s26, 1
      %p133 = por %p131, %p132
      %p135 = scmp.ne.s32.totalorder %s120, %s134
      %p136 = scmp.eq.s32.totalorder %s26, 0
      %p137 = por %p135, %p136
      %s138 = ssub.s32 %s27, %s39
      %s139 = ssub.s32 %s28, %s35
      %s140 = sor.u32 %s138, %s139
      %p141 = scmp.eq.s32.totalorder %s140, 0
      %s143 = sadd.s32 %s142, 1
      %s144 = scalar_select %p141, %s142, %s143
      %p147 = pneg %p141
      %p148 = scmp.eq.s32.totalorder %s20, 1
      %p149 = por %p147, %p148
      %p150 = scmp.ne.s32.totalorder %s142, %s145
      %p151 = scmp.eq.s32.totalorder %s20, 0
      %p152 = por %p150, %p151
      %p153 = scmp.ne.s32.totalorder %s142, %s145
      %p154 = scmp.eq.s32.totalorder %s25, 1
      %p155 = por %p153, %p154
      %p156 = scmp.ne.s32.totalorder %s145, %s146
      %p157 = scmp.eq.s32.totalorder %s25, 0
      %p158 = por %p156, %p157
      %p159 = scmp.ne.s32.totalorder %s145, %s146
      %p160 = scmp.eq.s32.totalorder %s26, 1
      %p161 = por %p159, %p160
      %p163 = scmp.ne.s32.totalorder %s146, %s162
      %p164 = scmp.eq.s32.totalorder %s26, 0
      %p165 = por %p163, %p164
      %p166 = scmp.le.s32.totalorder 1, %s20
      %p167 = scmp.lt.s32.totalorder %s20, 3
      %p168 = pnand %p166, %p167
      %p169 = pneg %p168
      // Predicated region
      $region9: #{_bottleneck_path.1} parent=5 // pred_check
        _
      $region10: #{_bottleneck_path.1} parent=5 // pred_check_branch
        %171 = sbr.rel (%p168) target = $region12
      $region11: #{_bottleneck_path.1} parent=5 // pred_region
        %s172 = ssub.s32 %s20, 1
        // Predicated region
        $region13: #{_bottleneck_path.1} parent=11 // pred_check
          %p173 = pneg %p109
        $region14: #{_bottleneck_path.1} parent=11 // pred_check_branch
          %175 = sbr.rel (%p173) target = $region16
        $region15: #{_bottleneck_path.1} parent=11 // pred_region
          %s177 = ssub.s32 128, 128
          %178 = vsyncadd [#allocation6], %s177
          %s180 = sshll.u32 [#allocation7], 4
          %s181 = int_to_ptr.vmem [resolvable:$true] %s180
          %183 = dma.hbm_to_vmem [thread:$0]  %s2, 128, %s181, [#allocation6]
        $region16: #{_bottleneck_path.1} parent=11 // pred_fallthru
          _
        // Predicated region
        $region17: #{_bottleneck_path.1} parent=11 // pred_check
          %p184 = pneg %p130
        $region18: #{_bottleneck_path.1} parent=11 // pred_check_branch
          %186 = sbr.rel (%p184) target = $region20
        $region19: #{_bottleneck_path.1} parent=11 // pred_region
          %s188 = ssub.s32 128, 128
          %189 = vsyncadd [#allocation9], %s188
          %s191 = sshll.u32 [#allocation8], 4
          %s192 = int_to_ptr.vmem [resolvable:$true] %s191
          %194 = dma.hbm_to_vmem [thread:$0]  %s3, 128, %s192, [#allocation9]
        $region20: #{_bottleneck_path.1} parent=11 // pred_fallthru
          _
      $region12: #{_bottleneck_path.1} parent=5 // pred_fallthru
        _
      %p195 = scmp.lt.s32.totalorder %s20, 2
      // Predicated region
      $region21: #{_bottleneck_path.1} parent=5 // pred_check
        %p196 = pneg %p195
      $region22: #{_bottleneck_path.1} parent=5 // pred_check_branch
        %198 = sbr.rel (%p196) target = $region24
      $region23: #{_bottleneck_path.1} parent=5 // pred_region
        // Predicated region
        $region25: #{_bottleneck_path.1} parent=23 // pred_check
          %p199 = pneg %p54
        $region26: #{_bottleneck_path.1} parent=23 // pred_check_branch
          %201 = sbr.rel (%p199) target = $region28
        $region27: #{_bottleneck_path.1} parent=23 // pred_region
          %s202 = sand.u32 %s44, 1
          %s203 = scalar_lea.sflag [#allocation3], %s202
          %s204 = sand.u32 %s44, 1
          %s205 = smul.addr %s204, 8
          %s206 = scalar_lea.vmem [#allocation2], %s205
          %s208 = ssub.s32 128, 128
          %209 = vsyncadd %s203, %s208
          %s210 = sadd.s32 %s28, %s27
          %s211 = smul.addr %s210, 128
          %s212 = scalar_lea.hbm %s0, %s211
          %s214 = sshll.u32 %s206, 4
          %s215 = int_to_ptr.vmem [resolvable:$true] %s214
          %217 = dma.hbm_to_vmem [thread:$0]  %s212, 128, %s215, %s203
        $region28: #{_bottleneck_path.1} parent=23 // pred_fallthru
          _
        // Predicated region
        $region29: #{_bottleneck_path.1} parent=23 // pred_check
          %p218 = pneg %p82
        $region30: #{_bottleneck_path.1} parent=23 // pred_check_branch
          %220 = sbr.rel (%p218) target = $region32
        $region31: #{_bottleneck_path.1} parent=23 // pred_region
          %s221 = sand.u32 %s20, 1
          %s222 = scalar_lea.sflag [#allocation6], %s221
          %s223 = sand.u32 %s72, 1
          %s224 = smul.addr %s223, 4
          %s225 = scalar_lea.vmem [#allocation5], %s224
          %s227 = ssub.s32 64, 64
          %228 = vsyncadd %s222, %s227
          %s229 = sadd.s32 %s28, %s27
          %s230 = smul.addr %s229, 64
          %s231 = scalar_lea.hbm %s1, %s230
          %s233 = sshll.u32 %s225, 4
          %s234 = int_to_ptr.vmem [resolvable:$true] %s233
          %236 = dma.hbm_to_vmem [thread:$0]  %s231, 64, %s234, %s222
        $region32: #{_bottleneck_path.1} parent=23 // pred_fallthru
          _
      $region24: #{_bottleneck_path.1} parent=5 // pred_fallthru
        _
      %p237 = scmp.le.s32.totalorder 1, %s20
      %p238 = scmp.lt.s32.totalorder %s20, 3
      %p239 = pnand %p237, %p238
      %p240 = pneg %p239
      // Predicated region
      $region33: #{_bottleneck_path.1} parent=5 // pred_check
        _
      $region34: #{_bottleneck_path.1} parent=5 // pred_check_branch
        %242 = sbr.rel (%p239) target = $region36
      $region35: #{_bottleneck_path.1} parent=5 // pred_region
        %s243 = ssub.s32 %s20, 1
        %s244 = sand.u32 %s47, 1
        %s245 = scalar_lea.sflag [#allocation3], %s244
        %s246 = sand.u32 %s47, 1
        %s247 = smul.addr %s246, 8
        %s248 = scalar_lea.vmem [#allocation2], %s247
        // Predicated region
        $region37: #{_bottleneck_path.1} parent=35 // pred_check
          %p249 = pneg %p60
        $region38: #{_bottleneck_path.1} parent=35 // pred_check_branch
          %251 = sbr.rel (%p249) target = $region40
        $region39: #{_bottleneck_path.1} parent=35 // pred_region
          %252 = dma.done %s245, 128
        $region40: #{_bottleneck_path.1} parent=35 // pred_fallthru
          _
        %s253 = sand.u32 %s25, 1
        %s254 = scalar_lea.sflag [#allocation6], %s253
        %s255 = sand.u32 %s75, 1
        %s256 = smul.addr %s255, 4
        %s257 = scalar_lea.vmem [#allocation5], %s256
        // Predicated region
        $region41: #{_bottleneck_path.1} parent=35 // pred_check
          %p258 = pneg %p88
        $region42: #{_bottleneck_path.1} parent=35 // pred_check_branch
          %260 = sbr.rel (%p258) target = $region44
        $region43: #{_bottleneck_path.1} parent=35 // pred_region
          %261 = dma.done %s254, 64
        $region44: #{_bottleneck_path.1} parent=35 // pred_fallthru
          _
        // Predicated region
        $region45: #{_bottleneck_path.1} parent=35 // pred_check
          %p262 = pneg %p109
        $region46: #{_bottleneck_path.1} parent=35 // pred_check_branch
          %264 = sbr.rel (%p262) target = $region48
        $region47: #{_bottleneck_path.1} parent=35 // pred_region
          %265 = dma.done [#allocation6], 128
        $region48: #{_bottleneck_path.1} parent=35 // pred_fallthru
          _
        // Predicated region
        $region49: #{_bottleneck_path.1} parent=35 // pred_check
          %p266 = pneg %p130
        $region50: #{_bottleneck_path.1} parent=35 // pred_check_branch
          %268 = sbr.rel (%p266) target = $region52
        $region51: #{_bottleneck_path.1} parent=35 // pred_region
          %269 = dma.done [#allocation9], 128
        $region52: #{_bottleneck_path.1} parent=35 // pred_fallthru
          _
        %s270 = sand.u32 %s47, 1
        %s271 = scalar_lea.sflag [#allocation3], %s270
        %s272 = sand.u32 %s47, 1
        %s273 = smul.addr %s272, 8
        %s274 = scalar_lea.vmem [#allocation2], %s273
        %p275 = pneg %p60
        %p276 = pneg %p57
        %s277 = sand.u32 %s25, 1
        %s278 = scalar_lea.sflag [#allocation6], %s277
        %s279 = sand.u32 %s75, 1
        %s280 = smul.addr %s279, 4
        %s281 = scalar_lea.vmem [#allocation5], %s280
        %p282 = pneg %p88
        %p283 = pneg %p85
        %p284 = pneg %p109
        %p285 = pneg %p106
        %p286 = pneg %p130
        %p287 = pneg %p127
        %p288 = pneg %p158
        %p289 = pneg %p155
        %s290 = sand.u32 %s145, 1
        %s291 = scalar_lea.sflag [#allocation4], %s290
        %s292 = sand.u32 %s145, 1
        %s293 = smul.addr %s292, 8
        %s294 = scalar_lea.vmem [#allocation10], %s293
        %v295 = vld [vmem:[#allocation7] sm:$0xff]
        %v296 = vld [vmem:[%s257] sm:$0xf]
        %v297 = vld [vmem:[#allocation8] sm:$0xff]
        %299 = vset.pattern.permute.xlu0 0
        %300 = vperm.xlu0 %299, %v297
        %v301 = vpop.permute.xlu0 %300
        %vm303 = vcmask 31744
        %v305 = vsel %vm303, %v295, 0
        %vm307 = vcmask 1043456
        %v309 = vsel %vm307, %v296, 0
        %311 = vmatprep.subr.mxu0 0.0
        %312 = vmatpush1.msra.mxu0 %v309
        %313 = vmatprep.subr.mxu0 0.0
        %314 = vmatpush1.msra.mxu0 0.0
        %315 = vmatprep.subr.mxu0 0.0
        %316 = vmatpush1.msra.mxu0 0.0
        %317 = vmatprep.subr.mxu0 0.0
        %318 = vmatpush1.msra.mxu0 0.0
        %319 = vmatprep.subr.mxu0 0.0
        %320 = vmatpush1.msra.mxu0 0.0
        %321 = vmatprep.subr.mxu0 0.0
        %322 = vmatpush1.msra.mxu0 0.0
        %323 = vmatprep.subr.mxu0 0.0
        %324 = vmatpush1.msra.mxu0 0.0
        %325 = vmatprep.subr.mxu0 0.0
        %326 = vmatpush1.msra.mxu0 0.0
        %327 = vmatprep.subr.mxu0 0.0
        %328 = vmatpush1.msra.mxu0 0.0
        %329 = vmatprep.subr.mxu0 0.0
        %330 = vmatpush1.msra.mxu0 0.0
        %331 = vmatprep.subr.mxu0 0.0
        %332 = vmatpush1.msra.mxu0 0.0
        %333 = vmatprep.subr.mxu0 0.0
        %334 = vmatpush1.msra.mxu0 0.0
        %335 = vmatprep.subr.mxu0 0.0
        %336 = vmatpush1.msra.mxu0 0.0
        %337 = vmatprep.subr.mxu0 0.0
        %338 = vmatpush1.msra.mxu0 0.0
        %339 = vmatprep.subr.mxu0 0.0
        %340 = vmatpush1.msra.mxu0 0.0
        %341 = vmatprep.subr.mxu0 0.0
        %342 = vmatpush1.msra.mxu0 0.0
        %343 = vmatprep.subr.mxu0 0.0
        %344 = vmatpush1.msra.mxu0 0.0
        %345 = vmatprep.subr.mxu0 0.0
        %346 = vmatpush1.msra.mxu0 0.0
        %347 = vmatprep.subr.mxu0 0.0
        %348 = vmatpush1.msra.mxu0 0.0
        %349 = vmatprep.subr.mxu0 0.0
        %350 = vmatpush1.msra.mxu0 0.0
        %351 = vmatprep.subr.mxu0 0.0
        %352 = vmatpush1.msra.mxu0 0.0
        %353 = vmatprep.subr.mxu0 0.0
        %354 = vmatpush1.msra.mxu0 0.0
        %355 = vmatprep.subr.mxu0 0.0
        %356 = vmatpush1.msra.mxu0 0.0
        %357 = vmatprep.subr.mxu0 0.0
        %358 = vmatpush1.msra.mxu0 0.0
        %359 = vmatprep.subr.mxu0 0.0
        %360 = vmatpush1.msra.mxu0 0.0
        %361 = vmatprep.subr.mxu0 0.0
        %362 = vmatpush1.msra.mxu0 0.0
        %363 = vmatprep.subr.mxu0 0.0
        %364 = vmatpush1.msra.mxu0 0.0
        %365 = vmatprep.subr.mxu0 0.0
        %366 = vmatpush1.msra.mxu0 0.0
        %367 = vmatprep.subr.mxu0 0.0
        %368 = vmatpush1.msra.mxu0 0.0
        %369 = vmatprep.subr.mxu0 0.0
        %370 = vmatpush1.msra.mxu0 0.0
        %371 = vmatprep.subr.mxu0 0.0
        %372 = vmatpush1.msra.mxu0 0.0
        %373 = vmatprep.subr.mxu0 0.0
        %374 = vmatpush1.msra.mxu0 0.0
        %375 = vmatprep.mubr.f32.mxu0 0.0
        %376 = vmatmul.mubr.f32.gmra.mrb[0].mxu0 %v305
        %v377 = vpop.f32.mrb[0].mxu0
        %v378 = vadd.f32 %v301, %v377
        %v379 = vpop.f32.mrb[0].mxu0
        %380 = vdwg.mxu0
        %v381 = vld [vmem:[%s248] sm:$0xff]
        %v382 = vadd.f32 %v381, %v378
        %vm383 = vcmask 523264
        %384 = vst.msk [vmem:[%s294] sm:$0xff] %vm383, %v382
        %s385 = sand.u32 %s145, 1
        %s386 = scalar_lea.sflag [#allocation4], %s385
        %s387 = sand.u32 %s145, 1
        %s388 = smul.addr %s387, 8
        %s389 = scalar_lea.vmem [#allocation10], %s388
        // Predicated region
        $region53: #{_bottleneck_path.1} parent=35 // pred_check
          %p390 = pneg %p155
        $region54: #{_bottleneck_path.1} parent=35 // pred_check_branch
          %392 = sbr.rel (%p390) target = $region56
        $region55: #{_bottleneck_path.1} parent=35 // pred_region
          %s394 = ssub.s32 128, 128
          %395 = vsyncadd %s386, %s394
          %s396 = sadd.s32 %s30, %s29
          %s397 = smul.addr %s396, 128
          %s398 = scalar_lea.hbm %s4, %s397
          %s400 = sshll.u32 %s389, 4
          %s401 = int_to_ptr.vmem [resolvable:$true] %s400
          %403 = dma.vmem_to_hbm [thread:$0]  %s401, 128, %s398, %s386
        $region56: #{_bottleneck_path.1} parent=35 // pred_fallthru
          _
      $region36: #{_bottleneck_path.1} parent=5 // pred_fallthru
        _
      %p404 = scmp.le.s32.totalorder 2, %s20
      // Predicated region
      $region57: #{_bottleneck_path.1} parent=5 // pred_check
        %p405 = pneg %p404
      $region58: #{_bottleneck_path.1} parent=5 // pred_check_branch
        %407 = sbr.rel (%p405) target = $region60
      $region59: #{_bottleneck_path.1} parent=5 // pred_region
        %s408 = ssub.s32 %s20, 2
        // Predicated region
        $region61: #{_bottleneck_path.1} parent=59 // pred_check
          %p409 = pneg %p161
        $region62: #{_bottleneck_path.1} parent=59 // pred_check_branch
          %411 = sbr.rel (%p409) target = $region64
        $region63: #{_bottleneck_path.1} parent=59 // pred_region
          %s412 = sand.u32 %s146, 1
          %s413 = scalar_lea.sflag [#allocation4], %s412
          %s414 = sand.u32 %s146, 1
          %s415 = smul.addr %s414, 8
          %s416 = scalar_lea.vmem [#allocation10], %s415
          %417 = dma.done %s413, 128
        $region64: #{_bottleneck_path.1} parent=59 // pred_fallthru
          _
      $region60: #{_bottleneck_path.1} parent=5 // pred_fallthru
        _
    $region6: #{_bottleneck_path.1} parent=1 // loop_footer
      %s24 = sadd.s32 1, %s20
    $region7: #{_bottleneck_path.1} parent=1 // loop_footer_branch
      %19 = sbr.rel target = $region3
    $region8: #{_bottleneck_path.1} parent=1 // loop_exit
      _
    %418 = vsyncpa [#allocation3], 1
    %s419 = scalar_lea.sflag [#allocation3], 1
    %420 = vsyncpa %s419, 1
    %421 = vsyncpa [#allocation6], 1
    %s422 = scalar_lea.sflag [#allocation6], 1
    %423 = vsyncpa %s422, 1
    %424 = vsyncpa [#allocation9], 1
    %425 = vsyncpa [#allocation4], 1
    %s426 = scalar_lea.sflag [#allocation4], 1
    %427 = vsyncpa %s426, 1

</llo_original>
